<compile_context>
chip_gen: v7x
topology: tpu7x:2x2x1
jax: 0.10.0
libtpu: 0.0.40
codegen_flags: <defaults>
</compile_context>

<pallas_src>
import jax
import jax.numpy as jnp
from jax.experimental import pallas as pl
from jax.experimental.pallas import tpu as pltpu


def mlp_kernel(x_ref, *refs):
    """Fused MLP forward on one batch tile.

    refs = (w0, b0, w1, b1, ..., w_{L-1}, b_{L-1}, out_ref)
    Activation pattern mirrors the PyTorch module: Tanh after even hidden
    layers, ELU after odd hidden layers, no activation after the last layer.
    """
    out_ref = refs[-1]
    param_refs = refs[:-1]
    n_layers = len(param_refs) // 2

    # Keep the native dtype for the MXU operands (bf16 goes in at full rate);
    # the accumulator is f32 via preferred_element_type.
    h = x_ref[...]
    for l in range(n_layers):
        w = param_refs[2 * l][...]
        b = param_refs[2 * l + 1][...].astype(jnp.float32)   # (1, N) broadcast add
        h = jnp.dot(h, w, preferred_element_type=jnp.float32) + b
        if l < n_layers - 1:
            if l % 2 == 0:
                h = jnp.tanh(h)
            else:
                # ELU(alpha=1): clamp the exp argument so the (discarded)
                # positive branch never produces inf.
                h = jnp.where(h > 0, h, jnp.exp(jnp.minimum(h, 0.0)) - 1.0)
    out_ref[...] = h.astype(out_ref.dtype)


def _pick_batch_tile(batch, d_in, out_pad, itemsize):
    """Largest multiple-of-8 batch tile that fits comfortably in scoped VMEM.

    Accounts for BlockSpec double-buffering of the input and output tiles and
    derives the budget from the chip's reported VMEM capacity (64 MiB on v7x,
    128 MiB on v5e/v6e), so the same code sizes correctly on all generations.
    """
    try:
        cap = int(pltpu.get_tpu_info().vmem_capacity_bytes)
    except Exception:
        cap = 64 << 20  # conservative fallback (v7x physical VMEM)
    budget = min(cap // 4, 16 << 20)            # headroom under the scoped default
    per_row = 2 * (d_in + out_pad) * itemsize   # 2 pipeline buffers each for in/out
    tb = budget // max(per_row, 1)
    tb = max(8, min(int(tb), 8192))
    tb -= tb % 8
    b_pad8 = ((batch + 7) // 8) * 8
    return min(tb, b_pad8)


def init_mlp_params(key, input_dim, layers, output_dim, dtype=jnp.float32):
    """Parameter init matching the PyTorch module's layer shapes.

    Returns a flat list [w0, b0, w1, b1, ...] with w_l: (in, out), b_l: (1, out).
    (Uniform(-1/sqrt(fan_in), 1/sqrt(fan_in)); close to, not bit-identical to,
    PyTorch's kaiming_uniform default.)
    """
    params = []
    in_features = input_dim
    out_features = 16
    for l in range(layers):
        out_dim = output_dim if l == layers - 1 else out_features
        key, kw, kb = jax.random.split(key, 3)
        bound = 1.0 / float(in_features) ** 0.5
        w = jax.random.uniform(kw, (in_features, out_dim), dtype=dtype,
                               minval=-bound, maxval=bound)
        b = jax.random.uniform(kb, (1, out_dim), dtype=dtype,
                               minval=-bound, maxval=bound)
        params += [w, b]
        if l != layers - 1:
            in_features = out_features
            out_features = max(out_features // 2, 4)
    return params


def mlp_forward(x, params, output_dim):
    """x: (B, n_steps, features) -> (B, output_dim)."""
    b, n_steps, features = x.shape
    d_in = n_steps * features
    x2d = x.reshape(b, d_in)                     # view(b, n_steps*features)
    dtype = x.dtype
    itemsize = jnp.dtype(dtype).itemsize

    # Lane-dense output: pad the final layer's columns to a multiple of 128 so
    # the per-step output store is an unmasked dense store; slice afterwards.
    out_pad = max(128, ((output_dim + 127) // 128) * 128)
    params = list(params)
    w_last, b_last = params[-2], params[-1]
    if w_last.shape[1] != out_pad:
        params[-2] = jnp.pad(w_last, ((0, 0), (0, out_pad - w_last.shape[1])))
        params[-1] = jnp.pad(b_last, ((0, 0), (0, out_pad - b_last.shape[1])))

    # Batch-tiled grid (automatic HBM<->VMEM double-buffered pipelining).
    tb = _pick_batch_tile(b, d_in, out_pad, itemsize)
    n_tiles = pl.cdiv(b, tb)
    b_pad = n_tiles * tb
    if b_pad != b:
        x2d = jnp.pad(x2d, ((0, b_pad - b), (0, 0)))

    in_specs = [pl.BlockSpec((tb, d_in), lambda i: (i, 0))]
    # Weights/biases: full-array blocks, constant index_map -> resident in VMEM.
    for p in params:
        in_specs.append(pl.BlockSpec(p.shape, lambda i: (0, 0)))
    out_specs = pl.BlockSpec((tb, out_pad), lambda i: (i, 0))

    out = pl.pallas_call(
        mlp_kernel,
        out_shape=jax.ShapeDtypeStruct((b_pad, out_pad), dtype),
        grid=(n_tiles,),
        in_specs=in_specs,
        out_specs=out_specs,
        compiler_params=pltpu.CompilerParams(
            dimension_semantics=("parallel",)),   # 2x TCs on v7x, no-op elsewhere
    )(x2d, *params)
    return out[:b, :output_dim]


def mlp_reference(x, params, output_dim):
    """Pure-JAX reference for correctness checking."""
    b, n_steps, features = x.shape
    h = x.reshape(b, n_steps * features).astype(jnp.float32)
    n_layers = len(params) // 2
    for l in range(n_layers):
        w = params[2 * l].astype(jnp.float32)
        bias = params[2 * l + 1].astype(jnp.float32)
        h = h @ w + bias
        if l < n_layers - 1:
            h = jnp.tanh(h) if l % 2 == 0 else jnp.where(h > 0, h, jnp.exp(h) - 1.0)
    return h.astype(x.dtype)


if __name__ == "__main__":
    # Small shapes consistent with the module's forward:
    #   x: (batch=2, n_steps=8, features=4) -> input_dim = 32
    #   layers=3, output_dim=8
    # NOTE: at this size the problem fits a single vreg and wall clock is pure
    # launch/DMA overhead; the grid/tiling above is for realistic batch sizes.
    batch, n_steps, features = 2, 8, 4
    input_dim = n_steps * features
    layers = 3
    output_dim = 8

    key = jax.random.PRNGKey(0)
    key_x, key_p = jax.random.split(key)
    x = jax.random.normal(key_x, (batch, n_steps, features), dtype=jnp.float32)
    params = init_mlp_params(key_p, input_dim, layers, output_dim)

    out = mlp_forward(x, params, output_dim)
    out = jax.block_until_ready(out)

    ref = mlp_reference(x, params, output_dim)
    assert out.shape == (batch, output_dim), out.shape
    assert jnp.allclose(out, ref, atol=1e-5, rtol=1e-5), "mismatch vs reference"

    print("KERNEL_OK")
</pallas_src>

<mosaic_0001>
module attributes {stable_mosaic.version = 11 : i64} {
  func.func @mlp_kernel(%arg0: i32, %arg1: memref<8x32xf32, #tpu.memory_space<vmem>>, %arg2: memref<32x16xf32, #tpu.memory_space<vmem>>, %arg3: memref<1x16xf32, #tpu.memory_space<vmem>>, %arg4: memref<16x8xf32, #tpu.memory_space<vmem>>, %arg5: memref<1x8xf32, #tpu.memory_space<vmem>>, %arg6: memref<8x128xf32, #tpu.memory_space<vmem>>, %arg7: memref<1x128xf32, #tpu.memory_space<vmem>>, %arg8: memref<8x128xf32, #tpu.memory_space<vmem>>) attributes {dimension_semantics = [#tpu.dimension_semantics<parallel>], iteration_bounds = array<i64: 1>, scalar_prefetch = 0 : i64, scratch_operands = 0 : i64, tpu.core_type = #tpu.core_type<tc>, window_params = [{transform_indices = @transform_0, window_bounds = array<i64: 8, 32>}, {pipeline_mode = #tpu.pipeline_mode<synchronous>, transform_indices = @transform_1, window_bounds = array<i64: 32, 16>}, {pipeline_mode = #tpu.pipeline_mode<synchronous>, transform_indices = @transform_2, window_bounds = array<i64: 1, 16>}, {pipeline_mode = #tpu.pipeline_mode<synchronous>, transform_indices = @transform_3, window_bounds = array<i64: 16, 8>}, {pipeline_mode = #tpu.pipeline_mode<synchronous>, transform_indices = @transform_4, window_bounds = array<i64: 1, 8>}, {pipeline_mode = #tpu.pipeline_mode<synchronous>, transform_indices = @transform_5, window_bounds = array<i64: 8, 128>}, {pipeline_mode = #tpu.pipeline_mode<synchronous>, transform_indices = @transform_6, window_bounds = array<i64: 1, 128>}, {transform_indices = @transform_7, window_bounds = array<i64: 8, 128>}]} {
    %c0 = arith.constant 0 : index
    %c0_0 = arith.constant 0 : index
    %0 = vector.load %arg1[%c0, %c0_0] : memref<8x32xf32, #tpu.memory_space<vmem>>, vector<8x32xf32>
    %c0_1 = arith.constant 0 : index
    %c0_2 = arith.constant 0 : index
    %1 = vector.load %arg2[%c0_1, %c0_2] : memref<32x16xf32, #tpu.memory_space<vmem>>, vector<32x16xf32>
    %c0_3 = arith.constant 0 : index
    %c0_4 = arith.constant 0 : index
    %2 = vector.load %arg3[%c0_3, %c0_4] : memref<1x16xf32, #tpu.memory_space<vmem>>, vector<1x16xf32>
    %cst = arith.constant dense<0.000000e+00> : vector<8x16xf32>
    %3 = tpu.matmul %0, %1, %cst {dimension_numbers = #tpu.dot_dimension_numbers<[1], [0], [0], [1], [0, 0, 1, 1], [], []>} : vector<8x32xf32>, vector<32x16xf32>, vector<8x16xf32> -> vector<8x16xf32>
    %4 = vector.broadcast %2 : vector<1x16xf32> to vector<8x16xf32>
    %5 = arith.addf %3, %4 : vector<8x16xf32>
    %6 = math.tanh %5 : vector<8x16xf32>
    %c0_5 = arith.constant 0 : index
    %c0_6 = arith.constant 0 : index
    %7 = vector.load %arg4[%c0_5, %c0_6] : memref<16x8xf32, #tpu.memory_space<vmem>>, vector<16x8xf32>
    %c0_7 = arith.constant 0 : index
    %c0_8 = arith.constant 0 : index
    %8 = vector.load %arg5[%c0_7, %c0_8] : memref<1x8xf32, #tpu.memory_space<vmem>>, vector<1x8xf32>
    %cst_9 = arith.constant dense<0.000000e+00> : vector<8x8xf32>
    %9 = tpu.matmul %6, %7, %cst_9 {dimension_numbers = #tpu.dot_dimension_numbers<[1], [0], [0], [1], [0, 0, 1, 1], [], []>} : vector<8x16xf32>, vector<16x8xf32>, vector<8x8xf32> -> vector<8x8xf32>
    %10 = vector.broadcast %8 : vector<1x8xf32> to vector<8x8xf32>
    %11 = arith.addf %9, %10 : vector<8x8xf32>
    %cst_10 = arith.constant 0.000000e+00 : f32
    %12 = vector.broadcast %cst_10 : f32 to vector<8x8xf32>
    %13 = arith.cmpf ogt, %11, %12 : vector<8x8xf32>
    %cst_11 = arith.constant 0.000000e+00 : f32
    %14 = vector.broadcast %cst_11 : f32 to vector<8x8xf32>
    %15 = arith.minimumf %11, %14 : vector<8x8xf32>
    %16 = math.exp %15 : vector<8x8xf32>
    %cst_12 = arith.constant 1.000000e+00 : f32
    %17 = vector.broadcast %cst_12 : f32 to vector<8x8xf32>
    %18 = arith.subf %16, %17 : vector<8x8xf32>
    %19 = arith.select %13, %11, %18 : vector<8x8xi1>, vector<8x8xf32>
    %c0_13 = arith.constant 0 : index
    %c0_14 = arith.constant 0 : index
    %20 = vector.load %arg6[%c0_13, %c0_14] : memref<8x128xf32, #tpu.memory_space<vmem>>, vector<8x128xf32>
    %c0_15 = arith.constant 0 : index
    %c0_16 = arith.constant 0 : index
    %21 = vector.load %arg7[%c0_15, %c0_16] : memref<1x128xf32, #tpu.memory_space<vmem>>, vector<1x128xf32>
    %cst_17 = arith.constant dense<0.000000e+00> : vector<8x128xf32>
    %22 = tpu.matmul %19, %20, %cst_17 {dimension_numbers = #tpu.dot_dimension_numbers<[1], [0], [0], [1], [0, 0, 1, 1], [], []>} : vector<8x8xf32>, vector<8x128xf32>, vector<8x128xf32> -> vector<8x128xf32>
    %23 = vector.broadcast %21 : vector<1x128xf32> to vector<8x128xf32>
    %24 = arith.addf %22, %23 : vector<8x128xf32>
    %c0_18 = arith.constant 0 : index
    %c0_19 = arith.constant 0 : index
    %25 = vector.load %arg8[%c0_18, %c0_19] : memref<8x128xf32, #tpu.memory_space<vmem>>, vector<8x128xf32>
    tpu.vector_store %arg8[%c0_18, %c0_19], %24 {strides = array<i32>} : memref<8x128xf32, #tpu.memory_space<vmem>>, vector<8x128xf32>,
    return
  }
  func.func @transform_0(%arg0: i32) -> (i32, i32) {
    %c0_i32 = arith.constant 0 : i32
    %c0_i32_0 = arith.constant 0 : i32
    return %arg0, %c0_i32 : i32, i32
  }
  func.func @transform_1(%arg0: i32) -> (i32, i32) {
    %c0_i32 = arith.constant 0 : i32
    %c0_i32_0 = arith.constant 0 : i32
    %c0_i32_1 = arith.constant 0 : i32
    return %c0_i32, %c0_i32_0 : i32, i32
  }
  func.func @transform_2(%arg0: i32) -> (i32, i32) {
    %c0_i32 = arith.constant 0 : i32
    %c0_i32_0 = arith.constant 0 : i32
    %c0_i32_1 = arith.constant 0 : i32
    return %c0_i32, %c0_i32_0 : i32, i32
  }
  func.func @transform_3(%arg0: i32) -> (i32, i32) {
    %c0_i32 = arith.constant 0 : i32
    %c0_i32_0 = arith.constant 0 : i32
    %c0_i32_1 = arith.constant 0 : i32
    return %c0_i32, %c0_i32_0 : i32, i32
  }
  func.func @transform_4(%arg0: i32) -> (i32, i32) {
    %c0_i32 = arith.constant 0 : i32
    %c0_i32_0 = arith.constant 0 : i32
    %c0_i32_1 = arith.constant 0 : i32
    return %c0_i32, %c0_i32_0 : i32, i32
  }
  func.func @transform_5(%arg0: i32) -> (i32, i32) {
    %c0_i32 = arith.constant 0 : i32
    %c0_i32_0 = arith.constant 0 : i32
    %c0_i32_1 = arith.constant 0 : i32
    return %c0_i32, %c0_i32_0 : i32, i32
  }
  func.func @transform_6(%arg0: i32) -> (i32, i32) {
    %c0_i32 = arith.constant 0 : i32
    %c0_i32_0 = arith.constant 0 : i32
    %c0_i32_1 = arith.constant 0 : i32
    return %c0_i32, %c0_i32_0 : i32, i32
  }
  func.func @transform_7(%arg0: i32) -> (i32, i32) {
    %c0_i32 = arith.constant 0 : i32
    %c0_i32_0 = arith.constant 0 : i32
    return %arg0, %c0_i32 : i32, i32
  }
}

</mosaic_0001>

<llo_original>
// kernel: tpu_custom_call.1
$region0: #{tpu_custom_call.1}
  #allocation0 [shape = 'u32[]', space=smem, size = 0x4, offset = 0x4, fixed_abs, tag = 'smem constant byte address 0x4 - core index']
  #allocation1 [shape = 'u32[144,128]{1,0:T(1,128)}', space=vmem, size = 0x12000, scoped, tag = 'internal scratch']
  %s0 = inlined_call_operand.vmem [shape: f32[8,32], index: 0, kind: input, shape index: {}]
  %s1 = inlined_call_operand.vmem [shape: f32[32,16], index: 1, kind: input, shape index: {}]
  %s2 = inlined_call_operand.vmem [shape: f32[1,16], index: 2, kind: input, shape index: {}]
  %s3 = inlined_call_operand.vmem [shape: f32[16,8], index: 3, kind: input, shape index: {}]
  %s4 = inlined_call_operand.vmem [shape: f32[1,8], index: 4, kind: input, shape index: {}]
  %s5 = inlined_call_operand.vmem [shape: f32[8,128], index: 5, kind: input, shape index: {}]
  %s6 = inlined_call_operand.vmem [shape: f32[1,128], index: 6, kind: input, shape index: {}]
  %s7 = inlined_call_operand.hbm [shape: f32[8,128], index: 7, kind: output, shape index: {}]
  %s8 = sld [smem:[#allocation0]]
  $region38: #{tpu_custom_call.1} parent=0
    _
  %s10 = ssub.s32 1, %s8
  %s11 = scalar_select 0, %s10, %s8
  $region1: #{tpu_custom_call.1} parent=0
    #allocation2 [shape = 'u8[4096]{0}', space=vmem, size = 0x1000, scoped, tag = 'output window, operand 0, single buffered']
    #allocation3 [shape = 's32[1]{0}', space=sflag, size = 0x4, scoped, tag = 'scoped memory for tpu_custom_call.1']
    %12 = vsyncpa [#allocation3], 0
    // Predicated region
    $region2: #{tpu_custom_call.1} parent=1 // pred_check
      _
    $region3: #{tpu_custom_call.1} parent=1 // pred_check_branch
      %14 = sbr.rel (0) target = $region5
    $region4: #{tpu_custom_call.1} parent=1 // pred_region
      _
    $region5: #{tpu_custom_call.1} parent=1 // pred_fallthru
      _
    // Predicated region
    $region6: #{tpu_custom_call.1} parent=1 // pred_check
      _
    $region7: #{tpu_custom_call.1} parent=1 // pred_check_branch
      %16 = sbr.rel (0) target = $region9
    $region8: #{tpu_custom_call.1} parent=1 // pred_region
      _
    $region9: #{tpu_custom_call.1} parent=1 // pred_fallthru
      _
    // Predicated region
    $region10: #{tpu_custom_call.1} parent=1 // pred_check
      _
    $region11: #{tpu_custom_call.1} parent=1 // pred_check_branch
      %18 = sbr.rel (0) target = $region13
    $region12: #{tpu_custom_call.1} parent=1 // pred_region
      _
    $region13: #{tpu_custom_call.1} parent=1 // pred_fallthru
      _
    // Predicated region
    $region14: #{tpu_custom_call.1} parent=1 // pred_check
      _
    $region15: #{tpu_custom_call.1} parent=1 // pred_check_branch
      %20 = sbr.rel (0) target = $region17
    $region16: #{tpu_custom_call.1} parent=1 // pred_region
      _
    $region17: #{tpu_custom_call.1} parent=1 // pred_fallthru
      _
    // Predicated region
    $region18: #{tpu_custom_call.1} parent=1 // pred_check
      _
    $region19: #{tpu_custom_call.1} parent=1 // pred_check_branch
      %22 = sbr.rel (0) target = $region21
    $region20: #{tpu_custom_call.1} parent=1 // pred_region
      _
    $region21: #{tpu_custom_call.1} parent=1 // pred_fallthru
      _
    // Predicated region
    $region22: #{tpu_custom_call.1} parent=1 // pred_check
      _
    $region23: #{tpu_custom_call.1} parent=1 // pred_check_branch
      %24 = sbr.rel (0) target = $region25
    $region24: #{tpu_custom_call.1} parent=1 // pred_region
      _
    $region25: #{tpu_custom_call.1} parent=1 // pred_fallthru
      _
    // Predicated region
    $region26: #{tpu_custom_call.1} parent=1 // pred_check
      _
    $region27: #{tpu_custom_call.1} parent=1 // pred_check_branch
      %26 = sbr.rel (0) target = $region29
    $region28: #{tpu_custom_call.1} parent=1 // pred_region
      _
    $region29: #{tpu_custom_call.1} parent=1 // pred_fallthru
      _
    %v27 = vld [vmem:[%s0] sm:$0xff]
    %v28 = vld [vmem:[%s1] sm:$0xff]
    %v29 = vld [vmem:[%s1 + $0x8] sm:$0xff]
    %v30 = vld [vmem:[%s1 + $0x10] sm:$0xff]
    %v31 = vld [vmem:[%s1 + $0x18] sm:$0xff]
    %v32 = vld [vmem:[%s2] sm:$0x1]
    %v34 = vlaneseq
    %v35 = vshrl.u32 %v34, 7
    %v36 = vsub.s32 0, %v35
    %v37 = vrot.slane %v32, %v36
    %vm39 = vcmask 261120
    %v41 = vsel %vm39, %v27, 0
    %43 = vmatprep.subr.mxu0 0.0
    %44 = vmatpush1.msra.mxu0 %v28
    %45 = vmatprep.subr.mxu0 0.0
    %46 = vmatpush1.msra.mxu0 %v29
    %47 = vmatprep.subr.mxu0 0.0
    %48 = vmatpush1.msra.mxu0 %v30
    %49 = vmatprep.subr.mxu0 0.0
    %50 = vmatpush1.msra.mxu0 %v31
    %51 = vmatprep.subr.mxu0 0.0
    %52 = vmatpush1.msra.mxu0 0.0
    %53 = vmatprep.subr.mxu0 0.0
    %54 = vmatpush1.msra.mxu0 0.0
    %55 = vmatprep.subr.mxu0 0.0
    %56 = vmatpush1.msra.mxu0 0.0
    %57 = vmatprep.subr.mxu0 0.0
    %58 = vmatpush1.msra.mxu0 0.0
    %59 = vmatprep.subr.mxu0 0.0
    %60 = vmatpush1.msra.mxu0 0.0
    %61 = vmatprep.subr.mxu0 0.0
    %62 = vmatpush1.msra.mxu0 0.0
    %63 = vmatprep.subr.mxu0 0.0
    %64 = vmatpush1.msra.mxu0 0.0
    %65 = vmatprep.subr.mxu0 0.0
    %66 = vmatpush1.msra.mxu0 0.0
    %67 = vmatprep.subr.mxu0 0.0
    %68 = vmatpush1.msra.mxu0 0.0
    %69 = vmatprep.subr.mxu0 0.0
    %70 = vmatpush1.msra.mxu0 0.0
    %71 = vmatprep.subr.mxu0 0.0
    %72 = vmatpush1.msra.mxu0 0.0
    %73 = vmatprep.subr.mxu0 0.0
    %74 = vmatpush1.msra.mxu0 0.0
    %75 = vmatprep.subr.mxu0 0.0
    %76 = vmatpush1.msra.mxu0 0.0
    %77 = vmatprep.subr.mxu0 0.0
    %78 = vmatpush1.msra.mxu0 0.0
    %79 = vmatprep.subr.mxu0 0.0
    %80 = vmatpush1.msra.mxu0 0.0
    %81 = vmatprep.subr.mxu0 0.0
    %82 = vmatpush1.msra.mxu0 0.0
    %83 = vmatprep.subr.mxu0 0.0
    %84 = vmatpush1.msra.mxu0 0.0
    %85 = vmatprep.subr.mxu0 0.0
    %86 = vmatpush1.msra.mxu0 0.0
    %87 = vmatprep.subr.mxu0 0.0
    %88 = vmatpush1.msra.mxu0 0.0
    %89 = vmatprep.subr.mxu0 0.0
    %90 = vmatpush1.msra.mxu0 0.0
    %91 = vmatprep.subr.mxu0 0.0
    %92 = vmatpush1.msra.mxu0 0.0
    %93 = vmatprep.subr.mxu0 0.0
    %94 = vmatpush1.msra.mxu0 0.0
    %95 = vmatprep.subr.mxu0 0.0
    %96 = vmatpush1.msra.mxu0 0.0
    %97 = vmatprep.subr.mxu0 0.0
    %98 = vmatpush1.msra.mxu0 0.0
    %99 = vmatprep.subr.mxu0 0.0
    %100 = vmatpush1.msra.mxu0 0.0
    %101 = vmatprep.subr.mxu0 0.0
    %102 = vmatpush1.msra.mxu0 0.0
    %103 = vmatprep.subr.mxu0 0.0
    %104 = vmatpush1.msra.mxu0 0.0
    %105 = vmatprep.subr.mxu0 0.0
    %106 = vmatpush1.msra.mxu0 0.0
    %107 = vmatprep.mubr.f32.mxu0 0.0
    %108 = vmatmul.mubr.f32.gmra.mrb[0].mxu0 %v41
    %v109 = vpop.f32.mrb[0].mxu0
    %v110 = vadd.f32 %v37, %v109
    %v111 = vpop.f32.mrb[0].mxu0
    %112 = vdwg.mxu0
    %v113 = vtanh.pop %v110
    %v114 = vld [vmem:[%s3] sm:$0xff]
    %v115 = vld [vmem:[%s3 + $0x8] sm:$0xff]
    %v116 = vld [vmem:[%s4] sm:$0x1]
    %v118 = vlaneseq
    %v119 = vshrl.u32 %v118, 7
    %v120 = vsub.s32 0, %v119
    %v121 = vrot.slane %v116, %v120
    %vm123 = vcmask 130048
    %v125 = vsel %vm123, %v113, 0
    %127 = vmatprep.subr.mxu0 0.0
    %128 = vmatpush1.msra.mxu0 %v114
    %129 = vmatprep.subr.mxu0 0.0
    %130 = vmatpush1.msra.mxu0 %v115
    %131 = vmatprep.subr.mxu0 0.0
    %132 = vmatpush1.msra.mxu0 0.0
    %133 = vmatprep.subr.mxu0 0.0
    %134 = vmatpush1.msra.mxu0 0.0
    %135 = vmatprep.subr.mxu0 0.0
    %136 = vmatpush1.msra.mxu0 0.0
    %137 = vmatprep.subr.mxu0 0.0
    %138 = vmatpush1.msra.mxu0 0.0
    %139 = vmatprep.subr.mxu0 0.0
    %140 = vmatpush1.msra.mxu0 0.0
    %141 = vmatprep.subr.mxu0 0.0
    %142 = vmatpush1.msra.mxu0 0.0
    %143 = vmatprep.subr.mxu0 0.0
    %144 = vmatpush1.msra.mxu0 0.0
    %145 = vmatprep.subr.mxu0 0.0
    %146 = vmatpush1.msra.mxu0 0.0
    %147 = vmatprep.subr.mxu0 0.0
    %148 = vmatpush1.msra.mxu0 0.0
    %149 = vmatprep.subr.mxu0 0.0
    %150 = vmatpush1.msra.mxu0 0.0
    %151 = vmatprep.subr.mxu0 0.0
    %152 = vmatpush1.msra.mxu0 0.0
    %153 = vmatprep.subr.mxu0 0.0
    %154 = vmatpush1.msra.mxu0 0.0
    %155 = vmatprep.subr.mxu0 0.0
    %156 = vmatpush1.msra.mxu0 0.0
    %157 = vmatprep.subr.mxu0 0.0
    %158 = vmatpush1.msra.mxu0 0.0
    %159 = vmatprep.subr.mxu0 0.0
    %160 = vmatpush1.msra.mxu0 0.0
    %161 = vmatprep.subr.mxu0 0.0
    %162 = vmatpush1.msra.mxu0 0.0
    %163 = vmatprep.subr.mxu0 0.0
    %164 = vmatpush1.msra.mxu0 0.0
    %165 = vmatprep.subr.mxu0 0.0
    %166 = vmatpush1.msra.mxu0 0.0
    %167 = vmatprep.subr.mxu0 0.0
    %168 = vmatpush1.msra.mxu0 0.0
    %169 = vmatprep.subr.mxu0 0.0
    %170 = vmatpush1.msra.mxu0 0.0
    %171 = vmatprep.subr.mxu0 0.0
    %172 = vmatpush1.msra.mxu0 0.0
    %173 = vmatprep.subr.mxu0 0.0
    %174 = vmatpush1.msra.mxu0 0.0
    %175 = vmatprep.subr.mxu0 0.0
    %176 = vmatpush1.msra.mxu0 0.0
    %177 = vmatprep.subr.mxu0 0.0
    %178 = vmatpush1.msra.mxu0 0.0
    %179 = vmatprep.subr.mxu0 0.0
    %180 = vmatpush1.msra.mxu0 0.0
    %181 = vmatprep.subr.mxu0 0.0
    %182 = vmatpush1.msra.mxu0 0.0
    %183 = vmatprep.subr.mxu0 0.0
    %184 = vmatpush1.msra.mxu0 0.0
    %185 = vmatprep.subr.mxu0 0.0
    %186 = vmatpush1.msra.mxu0 0.0
    %187 = vmatprep.subr.mxu0 0.0
    %188 = vmatpush1.msra.mxu0 0.0
    %189 = vmatprep.subr.mxu0 0.0
    %190 = vmatpush1.msra.mxu0 0.0
    %191 = vmatprep.mubr.f32.mxu0 0.0
    %192 = vmatmul.mubr.f32.gmra.mrb[0].mxu0 %v125
    %v193 = vpop.f32.mrb[0].mxu0
    %v194 = vadd.f32 %v121, %v193
    %v195 = vpop.f32.mrb[0].mxu0
    %196 = vdwg.mxu0
    %vm197 = vcmp.gt.f32.partialorder %v194, 0.0
    %v198 = vmin.f32 %v194, 0.0
    %v199 = vmul.f32 %v198, 1.442695
    %v200 = vpow.pop %v199
    %v201 = vsub.f32 %v200, 1.0
    %v202 = vsel %vm197, %v194, %v201
    %v203 = vld [vmem:[%s5] sm:$0xff]
    %v204 = vld [vmem:[%s6] sm:$0x1]
    %v206 = vlaneseq
    %v207 = vshrl.u32 %v206, 7
    %v208 = vsub.s32 0, %v207
    %v209 = vrot.slane %v204, %v208
    %vm211 = vcmask 64512
    %v213 = vsel %vm211, %v202, 0
    %215 = vmatprep.subr.mxu0 0.0
    %216 = vmatpush1.msra.mxu0 %v203
    %217 = vmatprep.subr.mxu0 0.0
    %218 = vmatpush1.msra.mxu0 0.0
    %219 = vmatprep.subr.mxu0 0.0
    %220 = vmatpush1.msra.mxu0 0.0
    %221 = vmatprep.subr.mxu0 0.0
    %222 = vmatpush1.msra.mxu0 0.0
    %223 = vmatprep.subr.mxu0 0.0
    %224 = vmatpush1.msra.mxu0 0.0
    %225 = vmatprep.subr.mxu0 0.0
    %226 = vmatpush1.msra.mxu0 0.0
    %227 = vmatprep.subr.mxu0 0.0
    %228 = vmatpush1.msra.mxu0 0.0
    %229 = vmatprep.subr.mxu0 0.0
    %230 = vmatpush1.msra.mxu0 0.0
    %231 = vmatprep.subr.mxu0 0.0
    %232 = vmatpush1.msra.mxu0 0.0
    %233 = vmatprep.subr.mxu0 0.0
    %234 = vmatpush1.msra.mxu0 0.0
    %235 = vmatprep.subr.mxu0 0.0
    %236 = vmatpush1.msra.mxu0 0.0
    %237 = vmatprep.subr.mxu0 0.0
    %238 = vmatpush1.msra.mxu0 0.0
    %239 = vmatprep.subr.mxu0 0.0
    %240 = vmatpush1.msra.mxu0 0.0
    %241 = vmatprep.subr.mxu0 0.0
    %242 = vmatpush1.msra.mxu0 0.0
    %243 = vmatprep.subr.mxu0 0.0
    %244 = vmatpush1.msra.mxu0 0.0
    %245 = vmatprep.subr.mxu0 0.0
    %246 = vmatpush1.msra.mxu0 0.0
    %247 = vmatprep.subr.mxu0 0.0
    %248 = vmatpush1.msra.mxu0 0.0
    %249 = vmatprep.subr.mxu0 0.0
    %250 = vmatpush1.msra.mxu0 0.0
    %251 = vmatprep.subr.mxu0 0.0
    %252 = vmatpush1.msra.mxu0 0.0
    %253 = vmatprep.subr.mxu0 0.0
    %254 = vmatpush1.msra.mxu0 0.0
    %255 = vmatprep.subr.mxu0 0.0
    %256 = vmatpush1.msra.mxu0 0.0
    %257 = vmatprep.subr.mxu0 0.0
    %258 = vmatpush1.msra.mxu0 0.0
    %259 = vmatprep.subr.mxu0 0.0
    %260 = vmatpush1.msra.mxu0 0.0
    %261 = vmatprep.subr.mxu0 0.0
    %262 = vmatpush1.msra.mxu0 0.0
    %263 = vmatprep.subr.mxu0 0.0
    %264 = vmatpush1.msra.mxu0 0.0
    %265 = vmatprep.subr.mxu0 0.0
    %266 = vmatpush1.msra.mxu0 0.0
    %267 = vmatprep.subr.mxu0 0.0
    %268 = vmatpush1.msra.mxu0 0.0
    %269 = vmatprep.subr.mxu0 0.0
    %270 = vmatpush1.msra.mxu0 0.0
    %271 = vmatprep.subr.mxu0 0.0
    %272 = vmatpush1.msra.mxu0 0.0
    %273 = vmatprep.subr.mxu0 0.0
    %274 = vmatpush1.msra.mxu0 0.0
    %275 = vmatprep.subr.mxu0 0.0
    %276 = vmatpush1.msra.mxu0 0.0
    %277 = vmatprep.subr.mxu0 0.0
    %278 = vmatpush1.msra.mxu0 0.0
    %279 = vmatprep.mubr.f32.mxu0 0.0
    %280 = vmatmul.mubr.f32.gmra.mrb[0].mxu0 %v213
    %v281 = vpop.f32.mrb[0].mxu0
    %v282 = vadd.f32 %v209, %v281
    %v283 = vpop.f32.mrb[0].mxu0
    %284 = vdwg.mxu0
    %285 = vst [vmem:[#allocation2] sm:$0xff] %v282
    // Predicated region
    $region30: #{tpu_custom_call.1} parent=1 // pred_check
      _
    $region31: #{tpu_custom_call.1} parent=1 // pred_check_branch
      %287 = sbr.rel (0) target = $region33
    $region32: #{tpu_custom_call.1} parent=1 // pred_region
      %s289 = ssub.s32 128, 128
      %290 = vsyncadd [#allocation3], %s289
      %s292 = sshll.u32 [#allocation2], 4
      %s293 = int_to_ptr.vmem [resolvable:$true] %s292
      %295 = dma.vmem_to_hbm [thread:$0]  %s293, 128, %s7, [#allocation3]
    $region33: #{tpu_custom_call.1} parent=1 // pred_fallthru
      _
    // Predicated region
    $region34: #{tpu_custom_call.1} parent=1 // pred_check
      _
    $region35: #{tpu_custom_call.1} parent=1 // pred_check_branch
      %297 = sbr.rel (0) target = $region37
    $region36: #{tpu_custom_call.1} parent=1 // pred_region
      %298 = dma.done [#allocation3], 128
    $region37: #{tpu_custom_call.1} parent=1 // pred_fallthru
      _
    %299 = vsyncpa [#allocation3], 1

</llo_original>
